<compile_context>
chip_gen: v6e
topology: v6e:2x2x1
jax: 0.10.0
libtpu: 0.0.40
codegen_flags: <defaults>
</compile_context>

<pallas_src>
import functools

import jax
import jax.numpy as jnp
from jax.experimental import pallas as pl
from jax.experimental.pallas import tpu as pltpu


# ----------------------------------------------------------------------------
# Pallas kernel: HOGP_simple.forward hot path
# ----------------------------------------------------------------------------
def _hogp_forward_kernel(scalars_ref,      # SMEM (2,): [-0.5/ls^2, sv]
                         x_test_ref,       # VMEM (M, D) f32
                         x_train_t_ref,    # VMEM (D, N) f32
                         rhs_ref,          # VMEM (N, 2P) bf16 = [G_eff | S_eff]
                         var_base_ref,     # VMEM (1, 2P) f32 = [0 | sv*kron_diag]
                         out_ref):         # VMEM (M, 2P) f32 = [pred | var]
    f32 = jnp.float32
    scale = scalars_ref[0]                 # -0.5 / lengthscale^2
    sv = scalars_ref[1]                    # signal variance

    xt = x_test_ref[...]                   # (M, D)
    xr_t = x_train_t_ref[...]              # (D, N)
    d = xt.shape[1]

    # --- ARD RBF cross kernel k(x_test, x_train)  (M, N); elementwise in f32.
    if d <= 2:
        # ARDKernel(1) => D == 1: direct broadcast difference (exact, >= 0,
        # no divides, no zeros-init).
        diff = xt[:, 0:1] - xr_t[0:1, :]
        sq = diff * diff
        for dd in range(1, d):
            diff = xt[:, dd:dd + 1] - xr_t[dd:dd + 1, :]
            sq = sq + diff * diff
    else:
        # Fallback: contract on the MXU.  NOTE: single shared lengthscale
        # (ARDKernel(1) semantics); a true per-dimension ARD kernel would need
        # a (D,) scale vector applied before the contraction.
        xt_norm = jnp.sum(xt * xt, axis=1, keepdims=True)
        xr_norm = jnp.sum(xr_t * xr_t, axis=0, keepdims=True)
        cross = jnp.dot(xt, xr_t, preferred_element_type=f32)
        sq = jnp.maximum(xt_norm + xr_norm - 2.0 * cross, 0.0)

    k_star = sv * jnp.exp(scale * sq)      # (M, N) f32

    # --- one fused MXU matmul against the folded [G_eff | S_eff] right side.
    # bf16 operands (native MXU dtype on v5e/v6e/v7x), f32 accumulation.
    combined = jnp.dot(k_star.astype(jnp.bfloat16), rhs_ref[...],
                       preferred_element_type=f32)        # (M, 2P)

    # Single lane-dense store; the var half picks up the precomputed
    # sv*kron_diag base, the pred half gets +0 (var_base is zero-padded left).
    out_ref[...] = combined + var_base_ref[...]


# ----------------------------------------------------------------------------
# One-time prepare: fold everything that does not depend on x_test
# ----------------------------------------------------------------------------
def hogp_prepare(params, k_list, vec, a, g, x_train, output_shape):
    """Test-independent folding of log_likelihood() state (run once)."""
    n = x_train.shape[0]
    d1, d2 = output_shape
    p = d1 * d2
    k0, k1, k2 = k_list
    v1, v2 = vec[1], vec[2]

    g2 = g.reshape(n, p)                                  # mode-0 unfolding of g
    # S = A * A^(-1/2);  S_2 = S^2 == A exactly -> use A directly.
    a2 = a.reshape(n, p)                                  # mode-0 unfolding of A
    g_eff = g2 @ jnp.kron(k1, k2).T                       # (N, P)
    s_eff = k0 @ (a2 @ jnp.kron(v1 ** 2, v2 ** 2).T)      # (N, P)
    rhs = jnp.concatenate([g_eff, s_eff], axis=1).astype(jnp.bfloat16)  # (N, 2P)

    ls = jnp.exp(params['log_ls'][0][0].astype(jnp.float32))
    sv = jnp.exp(params['log_sv'][0][0].astype(jnp.float32))
    scalars = jnp.stack([-0.5 / (ls * ls), sv]).astype(jnp.float32)     # (2,)

    # diag(k(x,x)) == sv exactly for the ARD RBF kernel; pre-scale it here.
    kron_diag = (jnp.diagonal(k1)[:, None]
                 * jnp.diagonal(k2)[None, :]).reshape(1, p)
    var_base = jnp.concatenate(
        [jnp.zeros((1, p), jnp.float32), (sv * kron_diag).astype(jnp.float32)],
        axis=1)                                           # (1, 2P)

    x_train_t = x_train.T.astype(jnp.float32)             # (D, N)
    return scalars, x_train_t, rhs, var_base


# ----------------------------------------------------------------------------
# Per-call forward wrapper (jitted): pallas_call + split/reshape only
# ----------------------------------------------------------------------------
@functools.partial(jax.jit, static_argnames=("d1", "d2"))
def hogp_forward_pallas(scalars, x_test, x_train_t, rhs, var_base, *, d1, d2):
    """HOGP_simple.forward hot path: returns (predict_u, var_diag)."""
    m = x_test.shape[0]
    n = x_train_t.shape[1]
    twop = rhs.shape[1]
    p = d1 * d2

    smem = pl.BlockSpec(memory_space=pltpu.MemorySpace.SMEM)
    vmem = pl.BlockSpec(memory_space=pltpu.MemorySpace.VMEM)

    cost = pl.CostEstimate(
        flops=2 * m * n * twop + 6 * m * n,
        transcendentals=m * n,
        bytes_accessed=(scalars.size * 4 + x_test.size * 4 + x_train_t.size * 4
                        + rhs.size * 2 + var_base.size * 4 + m * twop * 4))

    # TODO(synk): if M (test points) ever scales, add a grid over M with
    # dimension_semantics=("parallel",) so both v7x TensorCores get rows, and
    # block rhs over (N, 2P) (column tile a multiple of 128, <=1024 on v7x's
    # 64 MiB VMEM) with an f32 accumulator over the N reduction axis.
    out = pl.pallas_call(
        _hogp_forward_kernel,
        out_shape=jax.ShapeDtypeStruct((m, twop), jnp.float32),
        in_specs=[smem, vmem, vmem, vmem, vmem],
        out_specs=vmem,
        cost_estimate=cost,
    )(scalars, x_test.astype(jnp.float32), x_train_t, rhs, var_base)

    pred = out[:, :p].reshape(m, d1, d2)
    var = out[:, p:].reshape(m, d1, d2)
    return pred, var


# ----------------------------------------------------------------------------
# Plain-JAX glue: ARD kernel, log_likelihood state setup, reference forward
# ----------------------------------------------------------------------------
def ard_kernel_host(x1, x2, log_ls, log_sv):
    ls = jnp.exp(log_ls)
    sv = jnp.exp(log_sv)
    a = x1 / ls
    b = x2 / ls
    sq = (jnp.sum(a * a, axis=1, keepdims=True)
          + jnp.sum(b * b, axis=1, keepdims=True).T
          - 2.0 * (a @ b.T))
    return sv * jnp.exp(-0.5 * sq)


def log_likelihood_setup(params, x_train, y_train, output_shape):
    """Mirrors HOGP_simple.log_likelihood state: K list, eigen pairs, A, g."""
    k_list = [ard_kernel_host(x_train, x_train,
                              params['log_ls'][0], params['log_sv'][0])]
    for i, _ in enumerate(output_shape):
        _in = params['mapping'][i] @ params['grid'][i]   # mode_dot(grid, mapping, 0)
        k_list.append(ard_kernel_host(_in, _in,
                                      params['log_ls'][i + 1], params['log_sv'][i + 1]))

    # TODO(synk): torch.linalg.eigh has no Pallas equivalent; eigendecomposition
    # stays in plain JAX (jnp.linalg.eigh), consistent with it being setup state.
    eig = [jnp.linalg.eigh(k) for k in k_list]
    lam = [e[0] for e in eig]
    vec = [e[1] for e in eig]

    n = x_train.shape[0]
    a = (lam[0][:, None, None] * lam[1][None, :, None] * lam[2][None, None, :]
         + (1.0 / params['noise_variance'])
         * jnp.ones((n,) + tuple(output_shape), jnp.float32))
    t1 = jnp.einsum('ni,aj,bk,nab->ijk', vec[0], vec[1], vec[2], y_train)
    g = jnp.einsum('pi,qj,rk,ijk->pqr', vec[0], vec[1], vec[2], t1 * (a ** -1.0))
    return k_list, vec, a, g


def ref_forward(params, k_list, vec, a, g, x_train, x_test):
    k_star = ard_kernel_host(x_test, x_train, params['log_ls'][0], params['log_sv'][0])
    k1, k2 = k_list[1], k_list[2]
    predict_u = jnp.einsum('mn,ia,jb,nab->mij', k_star, k1, k2, g)

    diag_k_dims = (jnp.diagonal(k1)[:, None] * jnp.diagonal(k2)[None, :])[None, :, :]
    diag_k_x = jnp.diagonal(
        ard_kernel_host(x_test, x_test, params['log_ls'][0], params['log_sv'][0])
    )[:, None, None]
    diag_k = diag_k_x * diag_k_dims

    s = a * a ** (-0.5)
    s2 = s ** 2
    evx = k_star @ k_list[0]
    s_prod = jnp.einsum('mn,ia,jb,nab->mij', evx, vec[1] ** 2, vec[2] ** 2, s2)
    return predict_u, diag_k + s_prod


# ----------------------------------------------------------------------------
if __name__ == "__main__":
    key = jax.random.PRNGKey(0)
    kx, kt, ky = jax.random.split(key, 3)

    N, M, D = 8, 8, 1                 # train points, test points, input dim
    output_shape = (8, 16)            # d1, d2  -> P = 128
    d1, d2 = output_shape

    x_train = jax.random.normal(kx, (N, D), jnp.float32)
    x_test = jax.random.normal(kt, (M, D), jnp.float32)
    y_train = jax.random.normal(ky, (N,) + output_shape, jnp.float32)

    # Deterministic parameter init (shapes follow HOGP_simple.__init__):
    # 3 ARD kernels (len(output_shape)+1), fixed grid = arange, mapping = eye.
    params = {
        'noise_variance': jnp.float32(0.1),
        'log_ls': [jnp.zeros((D,), jnp.float32),
                   jnp.full((1,), -0.3, jnp.float32),
                   jnp.full((1,), 0.2, jnp.float32)],
        'log_sv': [jnp.zeros((1,), jnp.float32),
                   jnp.full((1,), 0.1, jnp.float32),
                   jnp.full((1,), -0.1, jnp.float32)],
        'grid': [jnp.arange(v, dtype=jnp.float32).reshape(-1, 1) for v in output_shape],
        'mapping': [jnp.eye(v, dtype=jnp.float32) for v in output_shape],
    }

    # State from log_likelihood (required before forward, as in the PyTorch module).
    k_list, vec, A, g = log_likelihood_setup(params, x_train, y_train, output_shape)

    # One-time, test-independent prepare step; the per-call hot path reuses it.
    scalars, x_train_t, rhs, var_base = hogp_prepare(
        params, k_list, vec, A, g, x_train, output_shape)

    # Pallas forward (jitted wrapper: one pallas_call + split/reshape).
    pred, var = hogp_forward_pallas(scalars, x_test, x_train_t, rhs, var_base,
                                    d1=d1, d2=d2)
    pred = jax.block_until_ready(pred)
    var = jax.block_until_ready(var)

    # Pure-JAX f32 reference check (kernel uses bf16 MXU operands -> ~0.5% rel).
    pred_ref, var_ref = ref_forward(params, k_list, vec, A, g, x_train, x_test)
    assert pred.shape == (M,) + output_shape and var.shape == (M,) + output_shape
    assert jnp.allclose(pred, pred_ref, rtol=2e-2, atol=2e-2)
    assert jnp.allclose(var, var_ref, rtol=2e-2, atol=2e-2)

    print("KERNEL_OK")
</pallas_src>

<mosaic_0001>
module attributes {stable_mosaic.version = 11 : i64} {
  func.func @_hogp_forward_kernel(%arg0: memref<2xf32, #tpu.memory_space<smem>>, %arg1: memref<8x1xf32, #tpu.memory_space<vmem>>, %arg2: memref<1x8xf32, #tpu.memory_space<vmem>>, %arg3: memref<8x256xbf16, #tpu.memory_space<vmem>>, %arg4: memref<1x256xf32, #tpu.memory_space<vmem>>, %arg5: memref<8x256xf32, #tpu.memory_space<vmem>>) attributes {dimension_semantics = [], scalar_prefetch = 0 : i64, scratch_operands = 0 : i64, tpu.core_type = #tpu.core_type<tc>} {
    %c0 = arith.constant 0 : index
    %0 = memref.load %arg0[%c0] : memref<2xf32, #tpu.memory_space<smem>>
    %c1 = arith.constant 1 : index
    %1 = memref.load %arg0[%c1] : memref<2xf32, #tpu.memory_space<smem>>
    %c0_0 = arith.constant 0 : index
    %c0_1 = arith.constant 0 : index
    %2 = vector.load %arg1[%c0_0, %c0_1] : memref<8x1xf32, #tpu.memory_space<vmem>>, vector<8x1xf32>
    %c0_2 = arith.constant 0 : index
    %c0_3 = arith.constant 0 : index
    %3 = vector.load %arg2[%c0_2, %c0_3] : memref<1x8xf32, #tpu.memory_space<vmem>>, vector<1x8xf32>
    %4 = vector.broadcast %2 : vector<8x1xf32> to vector<8x8xf32>
    %5 = vector.broadcast %3 : vector<1x8xf32> to vector<8x8xf32>
    %6 = arith.subf %4, %5 : vector<8x8xf32>
    %7 = arith.mulf %6, %6 : vector<8x8xf32>
    %8 = vector.broadcast %0 : f32 to vector<8x8xf32>
    %9 = arith.mulf %8, %7 : vector<8x8xf32>
    %10 = math.exp %9 : vector<8x8xf32>
    %11 = vector.broadcast %1 : f32 to vector<8x8xf32>
    %12 = arith.mulf %11, %10 : vector<8x8xf32>
    %13 = arith.truncf %12 : vector<8x8xf32> to vector<8x8xbf16>
    %c0_4 = arith.constant 0 : index
    %c0_5 = arith.constant 0 : index
    %14 = vector.load %arg3[%c0_4, %c0_5] : memref<8x256xbf16, #tpu.memory_space<vmem>>, vector<8x256xbf16>
    %cst = arith.constant dense<0.000000e+00> : vector<8x256xf32>
    %15 = tpu.matmul %13, %14, %cst {dimension_numbers = #tpu.dot_dimension_numbers<[1], [0], [0], [1], [0, 0, 1, 1], [], []>} : vector<8x8xbf16>, vector<8x256xbf16>, vector<8x256xf32> -> vector<8x256xf32>
    %c0_6 = arith.constant 0 : index
    %c0_7 = arith.constant 0 : index
    %16 = vector.load %arg4[%c0_6, %c0_7] : memref<1x256xf32, #tpu.memory_space<vmem>>, vector<1x256xf32>
    %17 = vector.broadcast %16 : vector<1x256xf32> to vector<8x256xf32>
    %18 = arith.addf %15, %17 : vector<8x256xf32>
    %c0_8 = arith.constant 0 : index
    %c0_9 = arith.constant 0 : index
    %19 = vector.load %arg5[%c0_8, %c0_9] : memref<8x256xf32, #tpu.memory_space<vmem>>, vector<8x256xf32>
    tpu.vector_store %arg5[%c0_8, %c0_9], %18 {strides = array<i32>} : memref<8x256xf32, #tpu.memory_space<vmem>>, vector<8x256xf32>,
    return
  }
}

</mosaic_0001>

<llo_original>
// kernel: hogp_forward_pallas.1
$region0: #{hogp_forward_pallas.1}
  #allocation0 [shape = 'u32[]', space=smem, size = 0x4, offset = 0x4, fixed_abs, tag = 'smem constant byte address 0x4 - core index']
  #allocation1 [shape = 'u32[144,128]{1,0:T(1,128)}', space=vmem, size = 0x12000, scoped, tag = 'internal scratch']
  %s0 = inlined_call_operand.vmem [shape: f32[2], index: 0, kind: input, shape index: {}]
  %s1 = inlined_call_operand.vmem [shape: f32[8,1], index: 1, kind: input, shape index: {}]
  %s2 = inlined_call_operand.vmem [shape: f32[1,8], index: 2, kind: input, shape index: {}]
  %s3 = inlined_call_operand.vmem [shape: bf16[8,256], index: 3, kind: input, shape index: {}]
  %s4 = inlined_call_operand.vmem [shape: f32[1,256], index: 4, kind: input, shape index: {}]
  %s5 = inlined_call_operand.vmem [shape: f32[8,256], index: 5, kind: output, shape index: {}]
  %s6 = sld [smem:[#allocation0]]
  $region34: #{hogp_forward_pallas.1} parent=0
    _
  %s8 = ssub.s32 1, %s6
  %s9 = scalar_select 0, %s8, %s6
  $region1: #{hogp_forward_pallas.1} parent=0
    #allocation2 [shape = 'u8[512]{0}', space=smem, size = 0x200, scoped, tag = 'input window, operand 0, single buffered']
    #allocation3 [shape = 's32[1]{0}', space=sflag, size = 0x4, scoped, tag = 'scoped memory for hogp_forward_pallas.1']
    %10 = vsyncpa [#allocation3], 0
    // Predicated region
    $region2: #{hogp_forward_pallas.1} parent=1 // pred_check
      _
    $region3: #{hogp_forward_pallas.1} parent=1 // pred_check_branch
      %12 = sbr.rel (0) target = $region5
    $region4: #{hogp_forward_pallas.1} parent=1 // pred_region
      %s14 = ssub.s32 16, 16
      %15 = vsyncadd [#allocation3], %s14
      %s17 = sshll.u32 %s0, 4
      %s18 = int_to_ptr.vmem [resolvable:$true] %s17
      %20 = dma.vmem_to_smem %s18, 16, [#allocation2], [#allocation3]
    $region5: #{hogp_forward_pallas.1} parent=1 // pred_fallthru
      _
    // Predicated region
    $region6: #{hogp_forward_pallas.1} parent=1 // pred_check
      _
    $region7: #{hogp_forward_pallas.1} parent=1 // pred_check_branch
      %22 = sbr.rel (0) target = $region9
    $region8: #{hogp_forward_pallas.1} parent=1 // pred_region
      _
    $region9: #{hogp_forward_pallas.1} parent=1 // pred_fallthru
      _
    // Predicated region
    $region10: #{hogp_forward_pallas.1} parent=1 // pred_check
      _
    $region11: #{hogp_forward_pallas.1} parent=1 // pred_check_branch
      %24 = sbr.rel (0) target = $region13
    $region12: #{hogp_forward_pallas.1} parent=1 // pred_region
      _
    $region13: #{hogp_forward_pallas.1} parent=1 // pred_fallthru
      _
    // Predicated region
    $region14: #{hogp_forward_pallas.1} parent=1 // pred_check
      _
    $region15: #{hogp_forward_pallas.1} parent=1 // pred_check_branch
      %26 = sbr.rel (0) target = $region17
    $region16: #{hogp_forward_pallas.1} parent=1 // pred_region
      _
    $region17: #{hogp_forward_pallas.1} parent=1 // pred_fallthru
      _
    // Predicated region
    $region18: #{hogp_forward_pallas.1} parent=1 // pred_check
      _
    $region19: #{hogp_forward_pallas.1} parent=1 // pred_check_branch
      %28 = sbr.rel (0) target = $region21
    $region20: #{hogp_forward_pallas.1} parent=1 // pred_region
      _
    $region21: #{hogp_forward_pallas.1} parent=1 // pred_fallthru
      _
    // Predicated region
    $region22: #{hogp_forward_pallas.1} parent=1 // pred_check
      _
    $region23: #{hogp_forward_pallas.1} parent=1 // pred_check_branch
      %30 = sbr.rel (0) target = $region25
    $region24: #{hogp_forward_pallas.1} parent=1 // pred_region
      %31 = dma.done [#allocation3], 16
    $region25: #{hogp_forward_pallas.1} parent=1 // pred_fallthru
      _
    %32 = sfence
    %s34 = sld [smem:[#allocation2]]
    %s35 = sld [smem:[#allocation2 + $0x1]]
    %v36 = vld [vmem:[%s1] sm:$0xff]
    %v37 = vld [vmem:[%s2] sm:$0x1]
    %39 = vset.pattern.permute.xlu0 0
    %40 = vperm.xlu0 %39, %v36
    %v41 = vpop.permute.xlu0 %40
    %v44 = vlaneseq
    %v45 = vshrl.u32 %v44, 7
    %v46 = vsub.s32 0, %v45
    %v47 = vrot.slane %v37, %v46
    %v49 = vsub.f32 %v41, %v47
    %v50 = vmul.f32 %v49, %v49
    %v51 = vstv %s34
    %v52 = vmul.f32 %v51, %v50
    %v53 = vmul.f32 %v52, 1.442695
    %v54 = vpow.pop %v53
    %v55 = vstv %s35
    %v56 = vmul.f32 %v55, %v54
    %v57 = vpack.c.bf16 %v56, %v56
    %v58 = vld [vmem:[%s3] sm:$0xff]
    %v59 = vld [vmem:[%s4] sm:$0x3]
    %v61 = vlaneseq
    %v62 = vshrl.u32 %v61, 7
    %v63 = vsub.s32 0, %v62
    %v64 = vrot.slane %v59, %v63
    %v65 = vlaneseq
    %v66 = vshrl.u32 %v65, 7
    %v67 = vsub.s32 1, %v66
    %v68 = vrot.slane %v59, %v67
    %v72 = vunpack.c.l.b16 %v58
    %v73 = vunpack.c.h.b16 %v58
    %v74 = vpack.c.b16 %v72, %v72
    %v75 = vpack.c.b16 %v73, %v73
    %vm76 = vcmask 64512
    %v78 = vsel %vm76, %v57, 0
    %vm80 = vcmask 1043456
    %v82 = vsel %vm80, %v74, 0
    %v85 = vsel %vm80, %v75, 0
    %87 = vmatprep.subr.bf16.mxu0 0
    %88 = vmatpush1.bf16.msra.mxu0 0
    %89 = vmatprep.subr.bf16.mxu0 0
    %90 = vmatpush1.bf16.msra.mxu0 0
    %91 = vmatprep.subr.bf16.mxu0 0
    %92 = vmatpush1.bf16.msra.mxu0 0
    %93 = vmatprep.subr.bf16.mxu0 0
    %94 = vmatpush1.bf16.msra.mxu0 0
    %95 = vmatprep.subr.bf16.mxu0 0
    %96 = vmatpush1.bf16.msra.mxu0 0
    %97 = vmatprep.subr.bf16.mxu0 0
    %98 = vmatpush1.bf16.msra.mxu0 0
    %99 = vmatprep.subr.bf16.mxu0 0
    %100 = vmatpush1.bf16.msra.mxu0 0
    %101 = vmatprep.subr.bf16.mxu0 %v85
    %102 = vmatpush1.bf16.msra.mxu0 %v82
    %103 = vmatprep.subr.bf16.mxu0 0
    %104 = vmatpush2.bf16.msra.mxu0 0
    %105 = vmatprep.subr.bf16.mxu0 0
    %106 = vmatpush2.bf16.msra.mxu0 0
    %107 = vmatprep.subr.bf16.mxu0 0
    %108 = vmatpush2.bf16.msra.mxu0 0
    %109 = vmatprep.subr.bf16.mxu0 0
    %110 = vmatpush2.bf16.msra.mxu0 0
    %111 = vmatprep.subr.bf16.mxu0 0
    %112 = vmatpush2.bf16.msra.mxu0 0
    %113 = vmatprep.subr.bf16.mxu0 0
    %114 = vmatpush2.bf16.msra.mxu0 0
    %115 = vmatprep.subr.bf16.mxu0 0
    %116 = vmatpush2.bf16.msra.mxu0 0
    %117 = vmatprep.subr.bf16.mxu0 0
    %118 = vmatpush2.bf16.msra.mxu0 0
    %119 = vmatprep.mubr.bf16.mxu0 0
    %120 = vmatmul.mubr.bf16.gmra.mxu0 %v78
    %v121 = vpop.f32.mrf.mxu0
    %v122 = vadd.f32 %v64, %v121
    %v123 = vpop.f32.mrf.mxu0
    %v124 = vadd.f32 %v68, %v123
    %v125 = vpop.f32.mrf.mxu0
    %v126 = vpop.f32.mrf.mxu0
    %127 = vdwg.mxu0
    %128 = vst [vmem:[%s5] sm:$0xff] %v122
    %129 = vst [vmem:[%s5 + $0x8] sm:$0xff] %v124
    // Predicated region
    $region26: #{hogp_forward_pallas.1} parent=1 // pred_check
      _
    $region27: #{hogp_forward_pallas.1} parent=1 // pred_check_branch
      %131 = sbr.rel (0) target = $region29
    $region28: #{hogp_forward_pallas.1} parent=1 // pred_region
      _
    $region29: #{hogp_forward_pallas.1} parent=1 // pred_fallthru
      _
    // Predicated region
    $region30: #{hogp_forward_pallas.1} parent=1 // pred_check
      _
    $region31: #{hogp_forward_pallas.1} parent=1 // pred_check_branch
      %133 = sbr.rel (0) target = $region33
    $region32: #{hogp_forward_pallas.1} parent=1 // pred_region
      _
    $region33: #{hogp_forward_pallas.1} parent=1 // pred_fallthru
      _
    %134 = vsyncpa [#allocation3], 1

</llo_original>
